<compile_context>
chip_gen: v7x
topology: tpu7x:2x2x1
jax: 0.10.0
libtpu: 0.0.40
codegen_flags: <defaults>
</compile_context>

<pallas_src>
import functools

import jax
import jax.numpy as jnp
from jax.experimental import pallas as pl
from jax.experimental.pallas import tpu as pltpu

EPS = 1e-5
LANES = 128                          # vreg lane width; slab last dim
ROW_TILE_MAX = 2048                  # (2048, 128) f32 = 1 MiB per pipeline buffer
FUSED_MAX_BYTES = 4 * 1024 * 1024    # per-channel slab cutoff for the fused path
VMEM_LIMIT = 32 * 1024 * 1024


def _cdiv(a, b):
    return (a + b - 1) // b


def _round_up(a, b):
    return _cdiv(a, b) * b


# ------------------------------ fused single-pass ------------------------------ #

def _fused_kernel(gb_ref, x_ref, o_ref, *, inv_m, n_pad, eps):
    """Whole channel slab resident in VMEM: stats + normalize in one pass."""
    c = pl.program_id(0)
    x = x_ref[...]                                   # (1, rows_pad, 128)
    mean = jnp.sum(x) * inv_m                        # zero padding adds nothing
    xc = x - mean
    # Each padded zero contributed (0 - mean)^2; remove exactly (n_pad static).
    ssq = jnp.sum(xc * xc) - n_pad * mean * mean
    var = jnp.maximum(ssq * inv_m, 0.0)              # biased variance
    scale = gb_ref[c, 0] * jax.lax.rsqrt(var + eps)  # gamma * inv_std
    o_ref[...] = xc * scale + gb_ref[c, 1]           # + beta


# ------------------------------- tiled two-pass -------------------------------- #

def _stats_kernel(gb_ref, x_ref, sb_ref, acc_ref, shift_ref,
                  *, inv_m, n_pad, eps, inv_tile):
    """Pass 1: shifted sum / sum-of-squares in (8,128) VMEM vector accumulators;
    per-channel scale/bias emitted to SMEM at the last tile."""
    c = pl.program_id(0)
    i = pl.program_id(1)
    last = pl.num_programs(1) - 1

    x = x_ref[...]                                   # (1, row_tile, 128)

    @pl.when(i == 0)
    def _():
        # Shift K = mean of the channel's first tile (conditioning only; the
        # final stats are exact for any K).
        shift_ref[0] = jnp.sum(x) * inv_tile
        acc_ref[...] = jnp.zeros_like(acc_ref)

    k = shift_ref[0]
    xs = x.reshape(-1, 8, LANES) - k                 # (row_tile//8, 8, 128)
    # Pure VPU adds into vreg-shaped accumulators; hides under the tile DMA.
    acc_ref[0, :, :] = acc_ref[0, :, :] + jnp.sum(xs, axis=0)
    acc_ref[1, :, :] = acc_ref[1, :, :] + jnp.sum(xs * xs, axis=0)

    @pl.when(i == last)
    def _():
        # Padded zeros contributed (-K) to s1 and K^2 to s2; remove exactly.
        s1 = jnp.sum(acc_ref[0, :, :]) + n_pad * k
        s2 = jnp.sum(acc_ref[1, :, :]) - n_pad * k * k
        d = s1 * inv_m
        mean = k + d
        var = jnp.maximum(s2 * inv_m - d * d, 0.0)   # biased variance
        scale = gb_ref[c, 0] * jax.lax.rsqrt(var + eps)
        sb_ref[c, 0] = scale
        sb_ref[c, 1] = gb_ref[c, 1] - mean * scale


def _normalize_kernel(sb_ref, x_ref, o_ref):
    """Pass 2: y = x * scale + bias; scale/bias read from SMEM."""
    c = pl.program_id(0)
    o_ref[...] = x_ref[...] * sb_ref[c, 0] + sb_ref[c, 1]


# ---------------------------------- wrapper ------------------------------------ #

def batchnorm2d_pallas(x_nchw, gamma, beta, *,
                       fused_max_bytes=FUSED_MAX_BYTES,
                       row_tile_max=ROW_TILE_MAX):
    """x_nchw: (N, C, H, W); gamma, beta: (C,). Training-mode BN forward."""
    n, c, h, w = x_nchw.shape
    m = n * h * w
    orig_dtype = x_nchw.dtype

    # Channel-major flat layout (for C=1 the transpose is a pure reshape).
    x_cm = jnp.transpose(x_nchw, (1, 0, 2, 3)).reshape(c, m).astype(jnp.float32)
    gb = jnp.stack([gamma.astype(jnp.float32), beta.astype(jnp.float32)],
                   axis=1)                                        # (C, 2)

    rows = _cdiv(m, LANES)
    rows8 = _round_up(rows, 8)
    slab_bytes = rows8 * LANES * 4
    use_fused = slab_bytes <= fused_max_bytes

    if use_fused:
        rows_pad = rows8
        n_tiles = 1
        row_tile = rows_pad
    else:
        # Pick tile count first so padding stays < 8 rows per tile (no ~2x
        # byte inflation just above a tile-multiple size).
        n_tiles = _cdiv(rows8, row_tile_max)
        row_tile = _round_up(_cdiv(rows8, n_tiles), 8)
        rows_pad = n_tiles * row_tile

    m_pad = rows_pad * LANES
    if m_pad != m:
        x_cm = jnp.pad(x_cm, ((0, 0), (0, m_pad - m)))   # zero pad (exact-correctable)
    x_slab = x_cm.reshape(c, rows_pad, LANES)

    inv_m = 1.0 / float(m)
    n_pad_f = float(m_pad - m)

    if use_fused:
        out_slab = pl.pallas_call(
            functools.partial(_fused_kernel, inv_m=inv_m, n_pad=n_pad_f, eps=EPS),
            out_shape=jax.ShapeDtypeStruct((c, rows_pad, LANES), jnp.float32),
            grid=(c,),
            in_specs=[pl.BlockSpec(memory_space=pltpu.MemorySpace.SMEM),
                      pl.BlockSpec((1, rows_pad, LANES), lambda ci: (ci, 0, 0))],
            out_specs=pl.BlockSpec((1, rows_pad, LANES), lambda ci: (ci, 0, 0)),
            compiler_params=pltpu.CompilerParams(
                dimension_semantics=("parallel",),
                vmem_limit_bytes=VMEM_LIMIT),
        )(gb, x_slab)
    else:
        # ---- Pass 1: per-channel stats -> (C, 2) scale/bias in SMEM ----
        scale_bias = pl.pallas_call(
            functools.partial(_stats_kernel, inv_m=inv_m, n_pad=n_pad_f, eps=EPS,
                              inv_tile=1.0 / float(row_tile * LANES)),
            out_shape=jax.ShapeDtypeStruct((c, 2), jnp.float32),
            grid=(c, n_tiles),
            in_specs=[pl.BlockSpec(memory_space=pltpu.MemorySpace.SMEM),
                      pl.BlockSpec((1, row_tile, LANES),
                                   lambda ci, i: (ci, i, 0))],
            out_specs=pl.BlockSpec(memory_space=pltpu.MemorySpace.SMEM),
            scratch_shapes=[pltpu.VMEM((2, 8, LANES), jnp.float32),
                            pltpu.SMEM((1,), jnp.float32)],
            compiler_params=pltpu.CompilerParams(
                dimension_semantics=("arbitrary", "arbitrary"),
                vmem_limit_bytes=VMEM_LIMIT),
        )(gb, x_slab)

        # ---- Pass 2: elementwise normalize, fully parallel pipelined grid ----
        out_slab = pl.pallas_call(
            _normalize_kernel,
            out_shape=jax.ShapeDtypeStruct((c, rows_pad, LANES), jnp.float32),
            grid=(c, n_tiles),
            in_specs=[pl.BlockSpec(memory_space=pltpu.MemorySpace.SMEM),
                      pl.BlockSpec((1, row_tile, LANES),
                                   lambda ci, i: (ci, i, 0))],
            out_specs=pl.BlockSpec((1, row_tile, LANES),
                                   lambda ci, i: (ci, i, 0)),
            compiler_params=pltpu.CompilerParams(
                dimension_semantics=("parallel", "parallel"),
                vmem_limit_bytes=VMEM_LIMIT),
        )(scale_bias, x_slab)

    y = out_slab.reshape(c, m_pad)[:, :m].reshape(c, n, h, w)
    return jnp.transpose(y, (1, 0, 2, 3)).astype(orig_dtype)


def _reference(x_nchw, gamma, beta):
    mean = jnp.mean(x_nchw, axis=(0, 2, 3), keepdims=True)
    var = jnp.mean((x_nchw - mean) ** 2, axis=(0, 2, 3), keepdims=True)
    g = gamma.reshape(1, -1, 1, 1)
    b = beta.reshape(1, -1, 1, 1)
    return g * (x_nchw - mean) / jnp.sqrt(var + EPS) + b


if __name__ == "__main__":
    key = jax.random.PRNGKey(0)

    # --- Module-faithful case: BatchNorm2d(1), NCHW = (2, 1, 16, 16) (fused path)
    N, C, H, W = 2, 1, 16, 16
    x = jax.random.normal(key, (N, C, H, W), dtype=jnp.float32)
    gamma = jnp.ones((C,), dtype=jnp.float32)      # BN init: gamma=1
    beta = jnp.zeros((C,), dtype=jnp.float32)      # BN init: beta=0

    bn = jax.jit(batchnorm2d_pallas)
    out = jax.block_until_ready(bn(x, gamma, beta))
    ref = _reference(x, gamma, beta)
    assert out.shape == (N, C, H, W)
    assert jnp.max(jnp.abs(out - ref)) < 1e-4, "fused path mismatch vs reference"

    # --- Exercise the tiled two-pass fallback on a tiny multi-tile, multi-channel,
    #     padded case (forced via small thresholds).
    k1, k2, k3 = jax.random.split(key, 3)
    N2, C2, H2, W2 = 2, 2, 30, 30
    x2 = jax.random.normal(k1, (N2, C2, H2, W2), dtype=jnp.float32) * 2.0 + 0.5
    g2 = 1.0 + 0.1 * jax.random.normal(k2, (C2,), dtype=jnp.float32)
    b2 = 0.1 * jax.random.normal(k3, (C2,), dtype=jnp.float32)

    bn_tiled = jax.jit(functools.partial(batchnorm2d_pallas,
                                         fused_max_bytes=0, row_tile_max=8))
    out2 = jax.block_until_ready(bn_tiled(x2, g2, b2))
    ref2 = _reference(x2, g2, b2)
    assert out2.shape == (N2, C2, H2, W2)
    assert jnp.max(jnp.abs(out2 - ref2)) < 1e-4, "tiled path mismatch vs reference"

    print("KERNEL_OK")
</pallas_src>

<mosaic_0001>
module attributes {stable_mosaic.version = 11 : i64} {
  func.func @_fused_kernel(%arg0: i32, %arg1: memref<1x2xf32, #tpu.memory_space<smem>>, %arg2: memref<1x8x128xf32, #tpu.memory_space<vmem>>, %arg3: memref<1x8x128xf32, #tpu.memory_space<vmem>>) attributes {dimension_semantics = [#tpu.dimension_semantics<parallel>], iteration_bounds = array<i64: 1>, scalar_prefetch = 0 : i64, scratch_operands = 0 : i64, tpu.core_type = #tpu.core_type<tc>, window_params = [{transform_indices = @transform_0, window_bounds = array<i64: 1, 2>}, {transform_indices = @transform_1, window_bounds = array<i64: 1, 8, 128>}, {transform_indices = @transform_2, window_bounds = array<i64: 1, 8, 128>}]} {
    %c0 = arith.constant 0 : index
    %c0_0 = arith.constant 0 : index
    %c0_1 = arith.constant 0 : index
    %0 = vector.load %arg2[%c0, %c0_0, %c0_1] : memref<1x8x128xf32, #tpu.memory_space<vmem>>, vector<1x8x128xf32>
    %1 = vector.shape_cast %0 : vector<1x8x128xf32> to vector<1x1x8x128xf32>
    %cst = arith.constant dense<0.000000e+00> : vector<1xf32>
    %2 = vector.multi_reduction <add>, %1, %cst [1, 2, 3] : vector<1x1x8x128xf32> to vector<1xf32>
    %3 = vector.shape_cast %2 : vector<1xf32> to vector<1x1x1x1xf32>
    %4 = vector.extract %3[0, 0, 0, 0] : f32 from vector<1x1x1x1xf32>
    %cst_2 = arith.constant 0.001953125 : f32
    %5 = arith.mulf %4, %cst_2 : f32
    %6 = vector.broadcast %5 : f32 to vector<1x8x128xf32>
    %7 = arith.subf %0, %6 : vector<1x8x128xf32>
    %8 = arith.mulf %7, %7 : vector<1x8x128xf32>
    %9 = vector.shape_cast %8 : vector<1x8x128xf32> to vector<1x1x8x128xf32>
    %cst_3 = arith.constant dense<0.000000e+00> : vector<1xf32>
    %10 = vector.multi_reduction <add>, %9, %cst_3 [1, 2, 3] : vector<1x1x8x128xf32> to vector<1xf32>
    %11 = vector.shape_cast %10 : vector<1xf32> to vector<1x1x1x1xf32>
    %12 = vector.extract %11[0, 0, 0, 0] : f32 from vector<1x1x1x1xf32>
    %cst_4 = arith.constant 5.120000e+02 : f32
    %13 = arith.mulf %cst_4, %5 : f32
    %14 = arith.mulf %13, %5 : f32
    %15 = arith.subf %12, %14 : f32
    %cst_5 = arith.constant 0.001953125 : f32
    %16 = arith.mulf %15, %cst_5 : f32
    %cst_6 = arith.constant 0.000000e+00 : f32
    %17 = arith.maximumf %16, %cst_6 : f32
    %18 = arith.index_cast %arg0 : i32 to index
    %c0_7 = arith.constant 0 : index
    %19 = memref.load %arg1[%18, %c0_7] : memref<1x2xf32, #tpu.memory_space<smem>>
    %cst_8 = arith.constant 9.99999974E-6 : f32
    %20 = arith.addf %17, %cst_8 : f32
    %21 = math.rsqrt %20 : f32
    %22 = arith.mulf %19, %21 : f32
    %23 = vector.broadcast %22 : f32 to vector<1x8x128xf32>
    %24 = arith.mulf %7, %23 : vector<1x8x128xf32>
    %25 = arith.index_cast %arg0 : i32 to index
    %c1 = arith.constant 1 : index
    %26 = memref.load %arg1[%25, %c1] : memref<1x2xf32, #tpu.memory_space<smem>>
    %27 = vector.broadcast %26 : f32 to vector<1x8x128xf32>
    %28 = arith.addf %24, %27 : vector<1x8x128xf32>
    %c0_9 = arith.constant 0 : index
    %c0_10 = arith.constant 0 : index
    %c0_11 = arith.constant 0 : index
    %29 = vector.load %arg3[%c0_9, %c0_10, %c0_11] : memref<1x8x128xf32, #tpu.memory_space<vmem>>, vector<1x8x128xf32>
    tpu.vector_store %arg3[%c0_9, %c0_10, %c0_11], %28 {strides = array<i32>} : memref<1x8x128xf32, #tpu.memory_space<vmem>>, vector<1x8x128xf32>,
    return
  }
  func.func @transform_0(%arg0: i32) -> (i32, i32) {
    %c0_i32 = arith.constant 0 : i32
    %c0_i32_0 = arith.constant 0 : i32
    %c0_i32_1 = arith.constant 0 : i32
    return %c0_i32, %c0_i32_0 : i32, i32
  }
  func.func @transform_1(%arg0: i32) -> (i32, i32, i32) {
    %c0_i32 = arith.constant 0 : i32
    %c0_i32_0 = arith.constant 0 : i32
    %c0_i32_1 = arith.constant 0 : i32
    return %arg0, %c0_i32, %c0_i32_0 : i32, i32, i32
  }
  func.func @transform_2(%arg0: i32) -> (i32, i32, i32) {
    %c0_i32 = arith.constant 0 : i32
    %c0_i32_0 = arith.constant 0 : i32
    %c0_i32_1 = arith.constant 0 : i32
    return %arg0, %c0_i32, %c0_i32_0 : i32, i32, i32
  }
}

</mosaic_0001>

<llo_original>
// kernel: batchnorm2d_pallas.1
$region0: #{batchnorm2d_pallas.1}
  #allocation0 [shape = 'u32[]', space=smem, size = 0x4, offset = 0x4, fixed_abs, tag = 'smem constant byte address 0x4 - core index']
  #allocation1 [shape = 'u32[144,128]{1,0:T(1,128)}', space=vmem, size = 0x12000, scoped, tag = 'internal scratch']
  %s0 = inlined_call_operand.vmem [shape: f32[1,2], index: 0, kind: input, shape index: {}]
  %s1 = inlined_call_operand.vmem [shape: f32[1,8,128], index: 1, kind: input, shape index: {}]
  %s2 = inlined_call_operand.vmem [shape: f32[1,8,128], index: 2, kind: output, shape index: {}]
  %s3 = sld [smem:[#allocation0]]
  $region22: #{batchnorm2d_pallas.1} parent=0
    _
  %s5 = ssub.s32 1, %s3
  %s6 = scalar_select 0, %s5, %s3
  $region1: #{batchnorm2d_pallas.1} parent=0
    #allocation2 [shape = 'u8[512]{0}', space=smem, size = 0x200, scoped, tag = 'input window, operand 0, single buffered']
    #allocation3 [shape = 's32[1]{0}', space=sflag, size = 0x4, scoped, tag = 'scoped memory for batchnorm2d_pallas.1']
    %7 = vsyncpa [#allocation3], 0
    // Predicated region
    $region2: #{batchnorm2d_pallas.1} parent=1 // pred_check
      _
    $region3: #{batchnorm2d_pallas.1} parent=1 // pred_check_branch
      %9 = sbr.rel (0) target = $region5
    $region4: #{batchnorm2d_pallas.1} parent=1 // pred_region
      %s11 = ssub.s32 16, 16
      %12 = vsyncadd [#allocation3], %s11
      %s14 = sshll.u32 %s0, 4
      %s15 = int_to_ptr.vmem [resolvable:$true] %s14
      %17 = dma.vmem_to_smem %s15, 16, [#allocation2], [#allocation3]
    $region5: #{batchnorm2d_pallas.1} parent=1 // pred_fallthru
      _
    // Predicated region
    $region6: #{batchnorm2d_pallas.1} parent=1 // pred_check
      _
    $region7: #{batchnorm2d_pallas.1} parent=1 // pred_check_branch
      %19 = sbr.rel (0) target = $region9
    $region8: #{batchnorm2d_pallas.1} parent=1 // pred_region
      _
    $region9: #{batchnorm2d_pallas.1} parent=1 // pred_fallthru
      _
    // Predicated region
    $region10: #{batchnorm2d_pallas.1} parent=1 // pred_check
      _
    $region11: #{batchnorm2d_pallas.1} parent=1 // pred_check_branch
      %21 = sbr.rel (0) target = $region13
    $region12: #{batchnorm2d_pallas.1} parent=1 // pred_region
      %22 = dma.done [#allocation3], 16
    $region13: #{batchnorm2d_pallas.1} parent=1 // pred_fallthru
      _
    %23 = sfence
    %v24 = vld [vmem:[%s1] sm:$0xff]
    %25 = vadd.xlane.f32.xlu0 %v24
    %v26 = vpop.xlane.xlu0 %25
    %v27 = vrot.slane %v26, 4
    %v28 = vadd.f32 %v26, %v27
    %v29 = vrot.slane %v28, 2
    %v30 = vadd.f32 %v28, %v29
    %v31 = vrot.slane %v30, 1
    %v32 = vadd.f32 %v30, %v31
    %s33 = vtos %v32
    %s34 = smul.f32 %s33, 0.001953125
    %v35 = vstv %s34
    %v36 = vsub.f32 %v24, %v35
    %v37 = vmul.f32 %v36, %v36
    %38 = vadd.xlane.f32.xlu0 %v37
    %v39 = vpop.xlane.xlu0 %38
    %v40 = vrot.slane %v39, 4
    %v41 = vadd.f32 %v39, %v40
    %v42 = vrot.slane %v41, 2
    %v43 = vadd.f32 %v41, %v42
    %v44 = vrot.slane %v43, 1
    %v45 = vadd.f32 %v43, %v44
    %s46 = vtos %v45
    %s47 = smul.f32 %s34, 512.0
    %s48 = smul.f32 %s47, %s34
    %s49 = ssub.f32 %s46, %s48
    %s50 = smul.f32 %s49, 0.001953125
    %s51 = smax.f32 %s50, 0.0
    %s52 = smul.u32 0, 128
    %s53 = sld [smem:[#allocation2 + %s52]]
    %s54 = sadd.f32 %s51, 1e-05
    %v55 = vstv %s54
    %v56 = vrsqrt.pop %v55
    %s57 = vtos %v56
    %s58 = smul.f32 %s53, %s57
    %v59 = vstv %s58
    %v60 = vmul.f32 %v36, %v59
    %s61 = sadd.s32 %s52, 1
    %s62 = sld [smem:[#allocation2 + %s61]]
    %v63 = vstv %s62
    %v64 = vadd.f32 %v60, %v63
    %65 = vst [vmem:[%s2] sm:$0xff] %v64
    // Predicated region
    $region14: #{batchnorm2d_pallas.1} parent=1 // pred_check
      _
    $region15: #{batchnorm2d_pallas.1} parent=1 // pred_check_branch
      %67 = sbr.rel (0) target = $region17
    $region16: #{batchnorm2d_pallas.1} parent=1 // pred_region
      _
    $region17: #{batchnorm2d_pallas.1} parent=1 // pred_fallthru
      _
    // Predicated region
    $region18: #{batchnorm2d_pallas.1} parent=1 // pred_check
      _
    $region19: #{batchnorm2d_pallas.1} parent=1 // pred_check_branch
      %69 = sbr.rel (0) target = $region21
    $region20: #{batchnorm2d_pallas.1} parent=1 // pred_region
      _
    $region21: #{batchnorm2d_pallas.1} parent=1 // pred_fallthru
      _
    %70 = vsyncpa [#allocation3], 1

</llo_original>
